<compile_context>
chip_gen: v5e
topology: v5e:2x2
jax: 0.10.0
libtpu: 0.0.40
codegen_flags: <defaults>
</compile_context>

<pallas_src>
import math
import functools

import jax
import jax.numpy as jnp
from jax import lax
from jax.experimental import pallas as pl
from jax.experimental.pallas import tpu as pltpu

HEAD = 4
HIDDEN = 32
D_K = HIDDEN // HEAD


# ---------------------------------------------------------------------------
# Fused MHA kernel: one grid step == one batch element.
# ---------------------------------------------------------------------------
def _fused_mha_kernel(q_ref, k_ref, v_ref, wqkv_ref, bqkv_ref, wo_ref, bo_ref, o_ref):
    # Block shapes: q/k/v/o: (1, S, HIDDEN); wqkv: (HIDDEN, 3*HIDDEN);
    # bqkv: (1, 3*HIDDEN); wo: (HIDDEN, HIDDEN); bo: (1, HIDDEN).
    S = q_ref.shape[1]

    xq = q_ref[0]                       # (S, HIDDEN)
    xk = k_ref[0]
    xv = v_ref[0]

    # Single fused projection matmul:
    #   rows [0:S]    x cols [0:H]   -> Q (1/sqrt(d_k) already folded in)
    #   rows [S:2S]   x cols [H:2H]  -> K
    #   rows [2S:3S]  x cols [2H:3H] -> V
    x_cat = jnp.concatenate([xq, xk, xv], axis=0)             # (3S, HIDDEN)
    qkv = (
        jnp.dot(x_cat, wqkv_ref[...], preferred_element_type=jnp.float32)
        + bqkv_ref[...]
    )                                                         # (3S, 3*HIDDEN)

    q = qkv[0:S, 0:HIDDEN]                                    # already scaled
    k = qkv[S:2 * S, HIDDEN:2 * HIDDEN]
    v = qkv[2 * S:3 * S, 2 * HIDDEN:3 * HIDDEN]

    # Per-head attention, fully unrolled within this single grid step.
    # Lane sub-slices only — no sublane transposes.
    head_ctx = []
    for h in range(HEAD):
        lo, hi = h * D_K, (h + 1) * D_K
        qh = q[:, lo:hi]                                      # (S, d_k)
        kh = k[:, lo:hi]
        vh = v[:, lo:hi]
        # q @ k^T via contraction on d_k (no explicit transpose of K).
        scores = lax.dot_general(
            qh, kh, (((1,), (1,)), ((), ())),
            preferred_element_type=jnp.float32)               # (S, S)
        m = jnp.max(scores, axis=-1, keepdims=True)           # XLU reduce
        p = jnp.exp(scores - m)                               # EUP
        denom = jnp.sum(p, axis=-1, keepdims=True)            # XLU reduce
        ctx_h = jnp.dot(p, vh, preferred_element_type=jnp.float32)   # (S, d_k)
        # Normalize after the PV matmul (EUP approximate reciprocal).
        head_ctx.append(ctx_h * pl.reciprocal(denom, approx=True))

    # Lane-dense (S, HIDDEN) context slab, then output projection in-kernel.
    ctx = jnp.concatenate(head_ctx, axis=1)                   # (S, HIDDEN)
    out = (
        jnp.dot(ctx, wo_ref[...], preferred_element_type=jnp.float32)
        + bo_ref[...]
    )
    o_ref[0] = out.astype(o_ref.dtype)


# ---------------------------------------------------------------------------
# Wrapper: single pallas_call over a batch-parallel grid.
# ---------------------------------------------------------------------------
@jax.jit
def multi_head_attention(params, query, key, value):
    B, S, Hd = query.shape
    assert Hd == HIDDEN

    # Fold 1/sqrt(d_k) into the Q projection weights/bias (one-time, outside
    # the kernel) and fuse W_q | W_k | W_v into a single (HIDDEN, 3*HIDDEN)
    # matrix so the projection is a single MXU matmul inside the kernel.
    scale = 1.0 / math.sqrt(D_K)
    wqkv = jnp.concatenate(
        [params["wq"] * scale, params["wk"], params["wv"]], axis=1)   # (H, 3H)
    bqkv = jnp.concatenate(
        [params["bq"] * scale, params["bk"], params["bv"]], axis=1)   # (1, 3H)

    blk = (1, S, HIDDEN)
    io_spec = pl.BlockSpec(blk, lambda b: (b, 0, 0))

    def full_spec(shape):
        # Weights: same block every grid step -> stays resident in VMEM.
        return pl.BlockSpec(shape, lambda b: (0, 0))

    return pl.pallas_call(
        _fused_mha_kernel,
        out_shape=jax.ShapeDtypeStruct((B, S, HIDDEN), query.dtype),
        grid=(B,),
        in_specs=[
            io_spec, io_spec, io_spec,
            full_spec(wqkv.shape), full_spec(bqkv.shape),
            full_spec(params["wo"].shape), full_spec(params["bo"].shape),
        ],
        out_specs=io_spec,
        compiler_params=pltpu.CompilerParams(
            dimension_semantics=("parallel",)),   # batch split across v7x TCs
    )(query, key, value, wqkv, bqkv, params["wo"], params["bo"])


# ---------------------------------------------------------------------------
# Deterministic parameter init (mimics nn.Linear default init shapes)
# ---------------------------------------------------------------------------
def init_params(rng):
    keys = jax.random.split(rng, 8)
    bound = 1.0 / math.sqrt(HIDDEN)

    def lin(kw, kb):
        w = jax.random.uniform(kw, (HIDDEN, HIDDEN), jnp.float32, -bound, bound)
        b = jax.random.uniform(kb, (1, HIDDEN), jnp.float32, -bound, bound)
        return w, b

    wq, bq = lin(keys[0], keys[1])
    wk, bk = lin(keys[2], keys[3])
    wv, bv = lin(keys[4], keys[5])
    wo, bo = lin(keys[6], keys[7])
    return dict(wq=wq, bq=bq, wk=wk, bk=bk, wv=wv, bv=bv, wo=wo, bo=bo)


# Pure-JAX reference for a correctness check.
def reference(params, query, key, value):
    B, S, Hd = query.shape

    def project(x, w, b):
        y = x.reshape(B * S, Hd) @ w + b
        return y.reshape(B, S, HEAD, D_K).transpose(0, 2, 1, 3)

    q = project(query, params["wq"], params["bq"])
    k = project(key, params["wk"], params["bk"])
    v = project(value, params["wv"], params["bv"])
    scores = jnp.einsum("bhqd,bhkd->bhqk", q, k) / math.sqrt(D_K)
    p = jax.nn.softmax(scores, axis=-1)
    x = jnp.einsum("bhqk,bhkd->bhqd", p, v)
    x = x.transpose(0, 2, 1, 3).reshape(B * S, Hd)
    return (x @ params["wo"] + params["bo"]).reshape(B, S, Hd)


if __name__ == "__main__":
    rng = jax.random.PRNGKey(0)
    p_rng, q_rng, k_rng, v_rng = jax.random.split(rng, 4)

    B, S = 2, 8
    params = init_params(p_rng)
    query = jax.random.normal(q_rng, (B, S, HIDDEN), jnp.float32)
    key = jax.random.normal(k_rng, (B, S, HIDDEN), jnp.float32)
    value = jax.random.normal(v_rng, (B, S, HIDDEN), jnp.float32)

    out = multi_head_attention(params, query, key, value)
    out = jax.block_until_ready(out)

    ref = reference(params, query, key, value)
    assert out.shape == (B, S, HIDDEN)
    # Slightly loose tolerance: softmax denominator uses the EUP approximate
    # reciprocal (pl.reciprocal(..., approx=True)).
    assert jnp.allclose(out, ref, atol=2e-3, rtol=2e-3), float(
        jnp.max(jnp.abs(out - ref)))

    print("KERNEL_OK")
</pallas_src>

<mosaic_0001>
module attributes {stable_mosaic.version = 11 : i64} {
  func.func @_fused_mha_kernel(%arg0: i32, %arg1: memref<1x8x32xf32, #tpu.memory_space<vmem>>, %arg2: memref<1x8x32xf32, #tpu.memory_space<vmem>>, %arg3: memref<1x8x32xf32, #tpu.memory_space<vmem>>, %arg4: memref<32x96xf32, #tpu.memory_space<vmem>>, %arg5: memref<1x96xf32, #tpu.memory_space<vmem>>, %arg6: memref<32x32xf32, #tpu.memory_space<vmem>>, %arg7: memref<1x32xf32, #tpu.memory_space<vmem>>, %arg8: memref<1x8x32xf32, #tpu.memory_space<vmem>>) attributes {dimension_semantics = [#tpu.dimension_semantics<parallel>], iteration_bounds = array<i64: 2>, scalar_prefetch = 0 : i64, scratch_operands = 0 : i64, tpu.core_type = #tpu.core_type<tc>, window_params = [{transform_indices = @transform_0, window_bounds = array<i64: 1, 8, 32>}, {transform_indices = @transform_1, window_bounds = array<i64: 1, 8, 32>}, {transform_indices = @transform_2, window_bounds = array<i64: 1, 8, 32>}, {pipeline_mode = #tpu.pipeline_mode<synchronous>, transform_indices = @transform_3, window_bounds = array<i64: 32, 96>}, {pipeline_mode = #tpu.pipeline_mode<synchronous>, transform_indices = @transform_4, window_bounds = array<i64: 1, 96>}, {pipeline_mode = #tpu.pipeline_mode<synchronous>, transform_indices = @transform_5, window_bounds = array<i64: 32, 32>}, {pipeline_mode = #tpu.pipeline_mode<synchronous>, transform_indices = @transform_6, window_bounds = array<i64: 1, 32>}, {transform_indices = @transform_7, window_bounds = array<i64: 1, 8, 32>}]} {
    %c0 = arith.constant 0 : index
    %c0_0 = arith.constant 0 : index
    %c0_1 = arith.constant 0 : index
    %0 = vector.load %arg1[%c0, %c0_0, %c0_1] : memref<1x8x32xf32, #tpu.memory_space<vmem>>, vector<1x8x32xf32>
    %1 = vector.shape_cast %0 : vector<1x8x32xf32> to vector<8x32xf32>
    %c0_2 = arith.constant 0 : index
    %c0_3 = arith.constant 0 : index
    %c0_4 = arith.constant 0 : index
    %2 = vector.load %arg2[%c0_2, %c0_3, %c0_4] : memref<1x8x32xf32, #tpu.memory_space<vmem>>, vector<1x8x32xf32>
    %3 = vector.shape_cast %2 : vector<1x8x32xf32> to vector<8x32xf32>
    %c0_5 = arith.constant 0 : index
    %c0_6 = arith.constant 0 : index
    %c0_7 = arith.constant 0 : index
    %4 = vector.load %arg3[%c0_5, %c0_6, %c0_7] : memref<1x8x32xf32, #tpu.memory_space<vmem>>, vector<1x8x32xf32>
    %5 = vector.shape_cast %4 : vector<1x8x32xf32> to vector<8x32xf32>
    %6 = tpu.concatenate %1, %3, %5 in 0 : vector<8x32xf32>, vector<8x32xf32>, vector<8x32xf32> -> vector<24x32xf32>
    %c0_8 = arith.constant 0 : index
    %c0_9 = arith.constant 0 : index
    %7 = vector.load %arg4[%c0_8, %c0_9] : memref<32x96xf32, #tpu.memory_space<vmem>>, vector<32x96xf32>
    %cst = arith.constant dense<0.000000e+00> : vector<24x96xf32>
    %8 = tpu.matmul %6, %7, %cst {dimension_numbers = #tpu.dot_dimension_numbers<[1], [0], [0], [1], [0, 0, 1, 1], [], []>} : vector<24x32xf32>, vector<32x96xf32>, vector<24x96xf32> -> vector<24x96xf32>
    %c0_10 = arith.constant 0 : index
    %c0_11 = arith.constant 0 : index
    %9 = vector.load %arg5[%c0_10, %c0_11] : memref<1x96xf32, #tpu.memory_space<vmem>>, vector<1x96xf32>
    %10 = vector.broadcast %9 : vector<1x96xf32> to vector<24x96xf32>
    %11 = arith.addf %8, %10 : vector<24x96xf32>
    %12 = vector.extract_strided_slice %11 {offsets = [0, 0], sizes = [8, 32], strides = [1, 1]} : vector<24x96xf32> to vector<8x32xf32>
    %13 = vector.extract_strided_slice %11 {offsets = [8, 32], sizes = [8, 32], strides = [1, 1]} : vector<24x96xf32> to vector<8x32xf32>
    %14 = vector.extract_strided_slice %11 {offsets = [16, 64], sizes = [8, 32], strides = [1, 1]} : vector<24x96xf32> to vector<8x32xf32>
    %15 = vector.extract_strided_slice %12 {offsets = [0, 0], sizes = [8, 8], strides = [1, 1]} : vector<8x32xf32> to vector<8x8xf32>
    %16 = vector.extract_strided_slice %13 {offsets = [0, 0], sizes = [8, 8], strides = [1, 1]} : vector<8x32xf32> to vector<8x8xf32>
    %17 = vector.extract_strided_slice %14 {offsets = [0, 0], sizes = [8, 8], strides = [1, 1]} : vector<8x32xf32> to vector<8x8xf32>
    %cst_12 = arith.constant dense<0.000000e+00> : vector<8x8xf32>
    %18 = tpu.matmul %15, %16, %cst_12 {dimension_numbers = #tpu.dot_dimension_numbers<[1], [1], [0], [0], [0, 0, 1, 0], [], []>} : vector<8x8xf32>, vector<8x8xf32>, vector<8x8xf32> -> vector<8x8xf32>
    %cst_13 = arith.constant dense<0xFF800000> : vector<8xf32>
    %19 = vector.multi_reduction <maximumf>, %18, %cst_13 [1] : vector<8x8xf32> to vector<8xf32>
    %20 = vector.shape_cast %19 : vector<8xf32> to vector<8x1xf32>
    %21 = vector.broadcast %20 : vector<8x1xf32> to vector<8x8xf32>
    %22 = arith.subf %18, %21 : vector<8x8xf32>
    %23 = math.exp %22 : vector<8x8xf32>
    %cst_14 = arith.constant dense<0.000000e+00> : vector<8xf32>
    %24 = vector.multi_reduction <add>, %23, %cst_14 [1] : vector<8x8xf32> to vector<8xf32>
    %25 = vector.shape_cast %24 : vector<8xf32> to vector<8x1xf32>
    %cst_15 = arith.constant dense<0.000000e+00> : vector<8x8xf32>
    %26 = tpu.matmul %23, %17, %cst_15 {dimension_numbers = #tpu.dot_dimension_numbers<[1], [0], [0], [1], [0, 0, 1, 1], [], []>} : vector<8x8xf32>, vector<8x8xf32>, vector<8x8xf32> -> vector<8x8xf32>
    %27 = tpu.reciprocal %25 {approx = true} : vector<8x1xf32> -> vector<8x1xf32>
    %28 = vector.broadcast %27 : vector<8x1xf32> to vector<8x8xf32>
    %29 = arith.mulf %26, %28 : vector<8x8xf32>
    %30 = vector.extract_strided_slice %12 {offsets = [0, 8], sizes = [8, 8], strides = [1, 1]} : vector<8x32xf32> to vector<8x8xf32>
    %31 = vector.extract_strided_slice %13 {offsets = [0, 8], sizes = [8, 8], strides = [1, 1]} : vector<8x32xf32> to vector<8x8xf32>
    %32 = vector.extract_strided_slice %14 {offsets = [0, 8], sizes = [8, 8], strides = [1, 1]} : vector<8x32xf32> to vector<8x8xf32>
    %cst_16 = arith.constant dense<0.000000e+00> : vector<8x8xf32>
    %33 = tpu.matmul %30, %31, %cst_16 {dimension_numbers = #tpu.dot_dimension_numbers<[1], [1], [0], [0], [0, 0, 1, 0], [], []>} : vector<8x8xf32>, vector<8x8xf32>, vector<8x8xf32> -> vector<8x8xf32>
    %cst_17 = arith.constant dense<0xFF800000> : vector<8xf32>
    %34 = vector.multi_reduction <maximumf>, %33, %cst_17 [1] : vector<8x8xf32> to vector<8xf32>
    %35 = vector.shape_cast %34 : vector<8xf32> to vector<8x1xf32>
    %36 = vector.broadcast %35 : vector<8x1xf32> to vector<8x8xf32>
    %37 = arith.subf %33, %36 : vector<8x8xf32>
    %38 = math.exp %37 : vector<8x8xf32>
    %cst_18 = arith.constant dense<0.000000e+00> : vector<8xf32>
    %39 = vector.multi_reduction <add>, %38, %cst_18 [1] : vector<8x8xf32> to vector<8xf32>
    %40 = vector.shape_cast %39 : vector<8xf32> to vector<8x1xf32>
    %cst_19 = arith.constant dense<0.000000e+00> : vector<8x8xf32>
    %41 = tpu.matmul %38, %32, %cst_19 {dimension_numbers = #tpu.dot_dimension_numbers<[1], [0], [0], [1], [0, 0, 1, 1], [], []>} : vector<8x8xf32>, vector<8x8xf32>, vector<8x8xf32> -> vector<8x8xf32>
    %42 = tpu.reciprocal %40 {approx = true} : vector<8x1xf32> -> vector<8x1xf32>
    %43 = vector.broadcast %42 : vector<8x1xf32> to vector<8x8xf32>
    %44 = arith.mulf %41, %43 : vector<8x8xf32>
    %45 = vector.extract_strided_slice %12 {offsets = [0, 16], sizes = [8, 8], strides = [1, 1]} : vector<8x32xf32> to vector<8x8xf32>
    %46 = vector.extract_strided_slice %13 {offsets = [0, 16], sizes = [8, 8], strides = [1, 1]} : vector<8x32xf32> to vector<8x8xf32>
    %47 = vector.extract_strided_slice %14 {offsets = [0, 16], sizes = [8, 8], strides = [1, 1]} : vector<8x32xf32> to vector<8x8xf32>
    %cst_20 = arith.constant dense<0.000000e+00> : vector<8x8xf32>
    %48 = tpu.matmul %45, %46, %cst_20 {dimension_numbers = #tpu.dot_dimension_numbers<[1], [1], [0], [0], [0, 0, 1, 0], [], []>} : vector<8x8xf32>, vector<8x8xf32>, vector<8x8xf32> -> vector<8x8xf32>
    %cst_21 = arith.constant dense<0xFF800000> : vector<8xf32>
    %49 = vector.multi_reduction <maximumf>, %48, %cst_21 [1] : vector<8x8xf32> to vector<8xf32>
    %50 = vector.shape_cast %49 : vector<8xf32> to vector<8x1xf32>
    %51 = vector.broadcast %50 : vector<8x1xf32> to vector<8x8xf32>
    %52 = arith.subf %48, %51 : vector<8x8xf32>
    %53 = math.exp %52 : vector<8x8xf32>
    %cst_22 = arith.constant dense<0.000000e+00> : vector<8xf32>
    %54 = vector.multi_reduction <add>, %53, %cst_22 [1] : vector<8x8xf32> to vector<8xf32>
    %55 = vector.shape_cast %54 : vector<8xf32> to vector<8x1xf32>
    %cst_23 = arith.constant dense<0.000000e+00> : vector<8x8xf32>
    %56 = tpu.matmul %53, %47, %cst_23 {dimension_numbers = #tpu.dot_dimension_numbers<[1], [0], [0], [1], [0, 0, 1, 1], [], []>} : vector<8x8xf32>, vector<8x8xf32>, vector<8x8xf32> -> vector<8x8xf32>
    %57 = tpu.reciprocal %55 {approx = true} : vector<8x1xf32> -> vector<8x1xf32>
    %58 = vector.broadcast %57 : vector<8x1xf32> to vector<8x8xf32>
    %59 = arith.mulf %56, %58 : vector<8x8xf32>
    %60 = vector.extract_strided_slice %12 {offsets = [0, 24], sizes = [8, 8], strides = [1, 1]} : vector<8x32xf32> to vector<8x8xf32>
    %61 = vector.extract_strided_slice %13 {offsets = [0, 24], sizes = [8, 8], strides = [1, 1]} : vector<8x32xf32> to vector<8x8xf32>
    %62 = vector.extract_strided_slice %14 {offsets = [0, 24], sizes = [8, 8], strides = [1, 1]} : vector<8x32xf32> to vector<8x8xf32>
    %cst_24 = arith.constant dense<0.000000e+00> : vector<8x8xf32>
    %63 = tpu.matmul %60, %61, %cst_24 {dimension_numbers = #tpu.dot_dimension_numbers<[1], [1], [0], [0], [0, 0, 1, 0], [], []>} : vector<8x8xf32>, vector<8x8xf32>, vector<8x8xf32> -> vector<8x8xf32>
    %cst_25 = arith.constant dense<0xFF800000> : vector<8xf32>
    %64 = vector.multi_reduction <maximumf>, %63, %cst_25 [1] : vector<8x8xf32> to vector<8xf32>
    %65 = vector.shape_cast %64 : vector<8xf32> to vector<8x1xf32>
    %66 = vector.broadcast %65 : vector<8x1xf32> to vector<8x8xf32>
    %67 = arith.subf %63, %66 : vector<8x8xf32>
    %68 = math.exp %67 : vector<8x8xf32>
    %cst_26 = arith.constant dense<0.000000e+00> : vector<8xf32>
    %69 = vector.multi_reduction <add>, %68, %cst_26 [1] : vector<8x8xf32> to vector<8xf32>
    %70 = vector.shape_cast %69 : vector<8xf32> to vector<8x1xf32>
    %cst_27 = arith.constant dense<0.000000e+00> : vector<8x8xf32>
    %71 = tpu.matmul %68, %62, %cst_27 {dimension_numbers = #tpu.dot_dimension_numbers<[1], [0], [0], [1], [0, 0, 1, 1], [], []>} : vector<8x8xf32>, vector<8x8xf32>, vector<8x8xf32> -> vector<8x8xf32>
    %72 = tpu.reciprocal %70 {approx = true} : vector<8x1xf32> -> vector<8x1xf32>
    %73 = vector.broadcast %72 : vector<8x1xf32> to vector<8x8xf32>
    %74 = arith.mulf %71, %73 : vector<8x8xf32>
    %75 = tpu.concatenate %29, %44, %59, %74 in 1 : vector<8x8xf32>, vector<8x8xf32>, vector<8x8xf32>, vector<8x8xf32> -> vector<8x32xf32>
    %c0_28 = arith.constant 0 : index
    %c0_29 = arith.constant 0 : index
    %76 = vector.load %arg6[%c0_28, %c0_29] : memref<32x32xf32, #tpu.memory_space<vmem>>, vector<32x32xf32>
    %cst_30 = arith.constant dense<0.000000e+00> : vector<8x32xf32>
    %77 = tpu.matmul %75, %76, %cst_30 {dimension_numbers = #tpu.dot_dimension_numbers<[1], [0], [0], [1], [0, 0, 1, 1], [], []>} : vector<8x32xf32>, vector<32x32xf32>, vector<8x32xf32> -> vector<8x32xf32>
    %c0_31 = arith.constant 0 : index
    %c0_32 = arith.constant 0 : index
    %78 = vector.load %arg7[%c0_31, %c0_32] : memref<1x32xf32, #tpu.memory_space<vmem>>, vector<1x32xf32>
    %79 = vector.broadcast %78 : vector<1x32xf32> to vector<8x32xf32>
    %80 = arith.addf %77, %79 : vector<8x32xf32>
    %c0_33 = arith.constant 0 : index
    %c0_34 = arith.constant 0 : index
    %c0_35 = arith.constant 0 : index
    %81 = vector.load %arg8[%c0_33, %c0_34, %c0_35] : memref<1x8x32xf32, #tpu.memory_space<vmem>>, vector<1x8x32xf32>
    %82 = vector.shape_cast %81 : vector<1x8x32xf32> to vector<8x32xf32>
    %83 = vector.shape_cast %80 : vector<8x32xf32> to vector<1x8x32xf32>
    tpu.vector_store %arg8[%c0_33, %c0_34, %c0_35], %83 {strides = array<i32>} : memref<1x8x32xf32, #tpu.memory_space<vmem>>, vector<1x8x32xf32>,
    return
  }
  func.func @transform_0(%arg0: i32) -> (i32, i32, i32) {
    %c0_i32 = arith.constant 0 : i32
    %c0_i32_0 = arith.constant 0 : i32
    %c0_i32_1 = arith.constant 0 : i32
    return %arg0, %c0_i32, %c0_i32_0 : i32, i32, i32
  }
  func.func @transform_1(%arg0: i32) -> (i32, i32, i32) {
    %c0_i32 = arith.constant 0 : i32
    %c0_i32_0 = arith.constant 0 : i32
    %c0_i32_1 = arith.constant 0 : i32
    return %arg0, %c0_i32, %c0_i32_0 : i32, i32, i32
  }
  func.func @transform_2(%arg0: i32) -> (i32, i32, i32) {
    %c0_i32 = arith.constant 0 : i32
    %c0_i32_0 = arith.constant 0 : i32
    %c0_i32_1 = arith.constant 0 : i32
    return %arg0, %c0_i32, %c0_i32_0 : i32, i32, i32
  }
  func.func @transform_3(%arg0: i32) -> (i32, i32) {
    %c0_i32 = arith.constant 0 : i32
    %c0_i32_0 = arith.constant 0 : i32
    %c0_i32_1 = arith.constant 0 : i32
    return %c0_i32, %c0_i32_0 : i32, i32
  }
  func.func @transform_4(%arg0: i32) -> (i32, i32) {
    %c0_i32 = arith.constant 0 : i32
    %c0_i32_0 = arith.constant 0 : i32
    %c0_i32_1 = arith.constant 0 : i32
    return %c0_i32, %c0_i32_0 : i32, i32
  }
  func.func @transform_5(%arg0: i32) -> (i32, i32) {
    %c0_i32 = arith.constant 0 : i32
    %c0_i32_0 = arith.constant 0 : i32
    %c0_i32_1 = arith.constant 0 : i32
    return %c0_i32, %c0_i32_0 : i32, i32
  }
  func.func @transform_6(%arg0: i32) -> (i32, i32) {
    %c0_i32 = arith.constant 0 : i32
    %c0_i32_0 = arith.constant 0 : i32
    %c0_i32_1 = arith.constant 0 : i32
    return %c0_i32, %c0_i32_0 : i32, i32
  }
  func.func @transform_7(%arg0: i32) -> (i32, i32, i32) {
    %c0_i32 = arith.constant 0 : i32
    %c0_i32_0 = arith.constant 0 : i32
    %c0_i32_1 = arith.constant 0 : i32
    return %arg0, %c0_i32, %c0_i32_0 : i32, i32, i32
  }
}

</mosaic_0001>

<llo_original>
// kernel: multi_head_attention.1
$region0: #{multi_head_attention.1}
  #allocation0 [shape = 'u32[]', space=smem, size = 0x4, offset = 0x4, fixed_abs, tag = 'smem constant byte address 0x4 - core index']
  #allocation1 [shape = 'u32[72,128]{1,0:T(1,128)}', space=vmem, size = 0x9000, scoped, tag = 'internal scratch']
  %s0 = inlined_call_operand.vmem [shape: f32[2,8,32], index: 0, kind: input, shape index: {}]
  %s1 = inlined_call_operand.vmem [shape: f32[2,8,32], index: 1, kind: input, shape index: {}]
  %s2 = inlined_call_operand.vmem [shape: f32[2,8,32], index: 2, kind: input, shape index: {}]
  %s3 = inlined_call_operand.vmem [shape: f32[32,96], index: 3, kind: input, shape index: {}]
  %s4 = inlined_call_operand.vmem [shape: f32[1,96], index: 4, kind: input, shape index: {}]
  %s5 = inlined_call_operand.vmem [shape: f32[32,32], index: 5, kind: input, shape index: {}]
  %s6 = inlined_call_operand.vmem [shape: f32[1,32], index: 6, kind: input, shape index: {}]
  %s7 = inlined_call_operand.hbm [shape: f32[2,8,32], index: 7, kind: output, shape index: {}]
  %s8 = sld [smem:[#allocation0]]
  $region61: #{multi_head_attention.1} parent=0
    _
  %s10 = ssub.s32 1, %s8
  %s11 = scalar_select 0, %s10, %s8
  $region1: #{multi_head_attention.1} parent=0
    #allocation2 [shape = 'u8[8192]{0}', space=vmem, size = 0x2000, scoped, tag = 'output window, operand 0']
    #allocation3 [shape = 's32[2]{0}', space=sflag, size = 0x8, scoped, tag = 'scoped memory for multi_head_attention.1']
    %12 = vsyncpa [#allocation3], 0
    %s13 = scalar_lea.sflag [#allocation3], 1
    %14 = vsyncpa %s13, 0
    loop: start=0, step=1, limit=4
    $region2: #{multi_head_attention.1} parent=1 // loop_pre_header
      _
    $region3: #{multi_head_attention.1} parent=1 // loop_header
      %s16 = sphi 0, %s20
      %p17 = scmp.ge.s32.totalorder %s16, 4
      %s26 = sphi 0, %s28
      %s29 = sphi 0, %s26
      %s30 = sphi 0, %s29
      %s46 = sphi 0, %s30
      %s52 = sphi 0, %s54
      %s55 = sphi 0, %s52
      %s56 = sphi 0, %s55
      %s72 = sphi 0, %s56
      %s78 = sphi 0, %s80
      %s81 = sphi 0, %s78
      %s82 = sphi 0, %s81
      %s98 = sphi 0, %s82
      %s102 = sphi 0, %s102
      %s104 = sphi 0, %s102
      %s105 = sphi 0, %s104
      %s119 = sphi 0, %s105
      %s123 = sphi 0, %s123
      %s125 = sphi 0, %s123
      %s126 = sphi 0, %s125
      %s140 = sphi 0, %s126
      %s144 = sphi 0, %s144
      %s146 = sphi 0, %s144
      %s147 = sphi 0, %s146
      %s161 = sphi 0, %s147
      %s165 = sphi 0, %s165
      %s167 = sphi 0, %s165
      %s168 = sphi 0, %s167
      %s182 = sphi 0, %s168
      %s188 = sphi 0, %s190
      %s191 = sphi 0, %s188
      %s192 = sphi 0, %s191
      %s208 = sphi 0, %s192
    $region4: #{multi_head_attention.1} parent=1 // loop_header_branch
      %19 = sbr.rel (%p17) target = $region8
    $region5: #{multi_head_attention.1} parent=1 // loop_body
      %s21 = ssub.s32 %s16, 1
      %s22 = ssub.s32 %s16, 2
      %s23 = sadd.s32 %s16, 1
      %s24 = ssub.s32 %s16, %s23
      %p25 = scmp.eq.s32.totalorder %s24, 0
      %s27 = sadd.s32 %s26, 1
      %s28 = scalar_select %p25, %s26, %s27
      %p31 = pneg %p25
      %p32 = scmp.eq.s32.totalorder %s16, 1
      %p33 = por %p31, %p32
      %p34 = scmp.ne.s32.totalorder %s26, %s29
      %p35 = scmp.eq.s32.totalorder %s16, 0
      %p36 = por %p34, %p35
      %p37 = scmp.ne.s32.totalorder %s26, %s29
      %p38 = scmp.eq.s32.totalorder %s21, 1
      %p39 = por %p37, %p38
      %p40 = scmp.ne.s32.totalorder %s29, %s30
      %p41 = scmp.eq.s32.totalorder %s21, 0
      %p42 = por %p40, %p41
      %p43 = scmp.ne.s32.totalorder %s29, %s30
      %p44 = scmp.eq.s32.totalorder %s22, 1
      %p45 = por %p43, %p44
      %p47 = scmp.ne.s32.totalorder %s30, %s46
      %p48 = scmp.eq.s32.totalorder %s22, 0
      %p49 = por %p47, %p48
      %s50 = ssub.s32 %s16, %s23
      %p51 = scmp.eq.s32.totalorder %s50, 0
      %s53 = sadd.s32 %s52, 1
      %s54 = scalar_select %p51, %s52, %s53
      %p57 = pneg %p51
      %p58 = scmp.eq.s32.totalorder %s16, 1
      %p59 = por %p57, %p58
      %p60 = scmp.ne.s32.totalorder %s52, %s55
      %p61 = scmp.eq.s32.totalorder %s16, 0
      %p62 = por %p60, %p61
      %p63 = scmp.ne.s32.totalorder %s52, %s55
      %p64 = scmp.eq.s32.totalorder %s21, 1
      %p65 = por %p63, %p64
      %p66 = scmp.ne.s32.totalorder %s55, %s56
      %p67 = scmp.eq.s32.totalorder %s21, 0
      %p68 = por %p66, %p67
      %p69 = scmp.ne.s32.totalorder %s55, %s56
      %p70 = scmp.eq.s32.totalorder %s22, 1
      %p71 = por %p69, %p70
      %p73 = scmp.ne.s32.totalorder %s56, %s72
      %p74 = scmp.eq.s32.totalorder %s22, 0
      %p75 = por %p73, %p74
      %s76 = ssub.s32 %s16, %s23
      %p77 = scmp.eq.s32.totalorder %s76, 0
      %s79 = sadd.s32 %s78, 1
      %s80 = scalar_select %p77, %s78, %s79
      %p83 = pneg %p77
      %p84 = scmp.eq.s32.totalorder %s16, 1
      %p85 = por %p83, %p84
      %p86 = scmp.ne.s32.totalorder %s78, %s81
      %p87 = scmp.eq.s32.totalorder %s16, 0
      %p88 = por %p86, %p87
      %p89 = scmp.ne.s32.totalorder %s78, %s81
      %p90 = scmp.eq.s32.totalorder %s21, 1
      %p91 = por %p89, %p90
      %p92 = scmp.ne.s32.totalorder %s81, %s82
      %p93 = scmp.eq.s32.totalorder %s21, 0
      %p94 = por %p92, %p93
      %p95 = scmp.ne.s32.totalorder %s81, %s82
      %p96 = scmp.eq.s32.totalorder %s22, 1
      %p97 = por %p95, %p96
      %p99 = scmp.ne.s32.totalorder %s82, %s98
      %p100 = scmp.eq.s32.totalorder %s22, 0
      %p101 = por %p99, %p100
      %s103 = sadd.s32 %s102, 1
      %p106 = scmp.eq.s32.totalorder %s16, 1
      %p107 = scmp.ne.s32.totalorder %s102, %s104
      %p108 = scmp.eq.s32.totalorder %s16, 0
      %p109 = por %p107, %p108
      %p110 = scmp.ne.s32.totalorder %s102, %s104
      %p111 = scmp.eq.s32.totalorder %s21, 1
      %p112 = por %p110, %p111
      %p113 = scmp.ne.s32.totalorder %s104, %s105
      %p114 = scmp.eq.s32.totalorder %s21, 0
      %p115 = por %p113, %p114
      %p116 = scmp.ne.s32.totalorder %s104, %s105
      %p117 = scmp.eq.s32.totalorder %s22, 1
      %p118 = por %p116, %p117
      %p120 = scmp.ne.s32.totalorder %s105, %s119
      %p121 = scmp.eq.s32.totalorder %s22, 0
      %p122 = por %p120, %p121
      %s124 = sadd.s32 %s123, 1
      %p127 = scmp.eq.s32.totalorder %s16, 1
      %p128 = scmp.ne.s32.totalorder %s123, %s125
      %p129 = scmp.eq.s32.totalorder %s16, 0
      %p130 = por %p128, %p129
      %p131 = scmp.ne.s32.totalorder %s123, %s125
      %p132 = scmp.eq.s32.totalorder %s21, 1
      %p133 = por %p131, %p132
      %p134 = scmp.ne.s32.totalorder %s125, %s126
      %p135 = scmp.eq.s32.totalorder %s21, 0
      %p136 = por %p134, %p135
      %p137 = scmp.ne.s32.totalorder %s125, %s126
      %p138 = scmp.eq.s32.totalorder %s22, 1
      %p139 = por %p137, %p138
      %p141 = scmp.ne.s32.totalorder %s126, %s140
      %p142 = scmp.eq.s32.totalorder %s22, 0
      %p143 = por %p141, %p142
      %s145 = sadd.s32 %s144, 1
      %p148 = scmp.eq.s32.totalorder %s16, 1
      %p149 = scmp.ne.s32.totalorder %s144, %s146
      %p150 = scmp.eq.s32.totalorder %s16, 0
      %p151 = por %p149, %p150
      %p152 = scmp.ne.s32.totalorder %s144, %s146
      %p153 = scmp.eq.s32.totalorder %s21, 1
      %p154 = por %p152, %p153
      %p155 = scmp.ne.s32.totalorder %s146, %s147
      %p156 = scmp.eq.s32.totalorder %s21, 0
      %p157 = por %p155, %p156
      %p158 = scmp.ne.s32.totalorder %s146, %s147
      %p159 = scmp.eq.s32.totalorder %s22, 1
      %p160 = por %p158, %p159
      %p162 = scmp.ne.s32.totalorder %s147, %s161
      %p163 = scmp.eq.s32.totalorder %s22, 0
      %p164 = por %p162, %p163
      %s166 = sadd.s32 %s165, 1
      %p169 = scmp.eq.s32.totalorder %s16, 1
      %p170 = scmp.ne.s32.totalorder %s165, %s167
      %p171 = scmp.eq.s32.totalorder %s16, 0
      %p172 = por %p170, %p171
      %p173 = scmp.ne.s32.totalorder %s165, %s167
      %p174 = scmp.eq.s32.totalorder %s21, 1
      %p175 = por %p173, %p174
      %p176 = scmp.ne.s32.totalorder %s167, %s168
      %p177 = scmp.eq.s32.totalorder %s21, 0
      %p178 = por %p176, %p177
      %p179 = scmp.ne.s32.totalorder %s167, %s168
      %p180 = scmp.eq.s32.totalorder %s22, 1
      %p181 = por %p179, %p180
      %p183 = scmp.ne.s32.totalorder %s168, %s182
      %p184 = scmp.eq.s32.totalorder %s22, 0
      %p185 = por %p183, %p184
      %s186 = ssub.s32 %s16, %s23
      %p187 = scmp.eq.s32.totalorder %s186, 0
      %s189 = sadd.s32 %s188, 1
      %s190 = scalar_select %p187, %s188, %s189
      %p193 = pneg %p187
      %p194 = scmp.eq.s32.totalorder %s16, 1
      %p195 = por %p193, %p194
      %p196 = scmp.ne.s32.totalorder %s188, %s191
      %p197 = scmp.eq.s32.totalorder %s16, 0
      %p198 = por %p196, %p197
      %p199 = scmp.ne.s32.totalorder %s188, %s191
      %p200 = scmp.eq.s32.totalorder %s21, 1
      %p201 = por %p199, %p200
      %p202 = scmp.ne.s32.totalorder %s191, %s192
      %p203 = scmp.eq.s32.totalorder %s21, 0
      %p204 = por %p202, %p203
      %p205 = scmp.ne.s32.totalorder %s191, %s192
      %p206 = scmp.eq.s32.totalorder %s22, 1
      %p207 = por %p205, %p206
      %p209 = scmp.ne.s32.totalorder %s192, %s208
      %p210 = scmp.eq.s32.totalorder %s22, 0
      %p211 = por %p209, %p210
      %p212 = scmp.le.s32.totalorder 1, %s16
      %p213 = scmp.lt.s32.totalorder %s16, 3
      %p214 = pnand %p212, %p213
      %p215 = pneg %p214
      // Predicated region
      $region9: #{multi_head_attention.1} parent=5 // pred_check
        _
      $region10: #{multi_head_attention.1} parent=5 // pred_check_branch
        %217 = sbr.rel (%p214) target = $region12
      $region11: #{multi_head_attention.1} parent=5 // pred_region
        %s218 = ssub.s32 %s16, 1
        // Predicated region
        $region13: #{multi_head_attention.1} parent=11 // pred_check
          %p219 = pneg %p115
        $region14: #{multi_head_attention.1} parent=11 // pred_check_branch
          %221 = sbr.rel (%p219) target = $region16
        $region15: #{multi_head_attention.1} parent=11 // pred_region
          _
        $region16: #{multi_head_attention.1} parent=11 // pred_fallthru
          _
        // Predicated region
        $region17: #{multi_head_attention.1} parent=11 // pred_check
          %p222 = pneg %p136
        $region18: #{multi_head_attention.1} parent=11 // pred_check_branch
          %224 = sbr.rel (%p222) target = $region20
        $region19: #{multi_head_attention.1} parent=11 // pred_region
          _
        $region20: #{multi_head_attention.1} parent=11 // pred_fallthru
          _
        // Predicated region
        $region21: #{multi_head_attention.1} parent=11 // pred_check
          %p225 = pneg %p157
        $region22: #{multi_head_attention.1} parent=11 // pred_check_branch
          %227 = sbr.rel (%p225) target = $region24
        $region23: #{multi_head_attention.1} parent=11 // pred_region
          _
        $region24: #{multi_head_attention.1} parent=11 // pred_fallthru
          _
        // Predicated region
        $region25: #{multi_head_attention.1} parent=11 // pred_check
          %p228 = pneg %p178
        $region26: #{multi_head_attention.1} parent=11 // pred_check_branch
          %230 = sbr.rel (%p228) target = $region28
        $region27: #{multi_head_attention.1} parent=11 // pred_region
          _
        $region28: #{multi_head_attention.1} parent=11 // pred_fallthru
          _
      $region12: #{multi_head_attention.1} parent=5 // pred_fallthru
        _
      %p231 = scmp.lt.s32.totalorder %s16, 2
      // Predicated region
      $region29: #{multi_head_attention.1} parent=5 // pred_check
        %p232 = pneg %p231
      $region30: #{multi_head_attention.1} parent=5 // pred_check_branch
        %234 = sbr.rel (%p232) target = $region32
      $region31: #{multi_head_attention.1} parent=5 // pred_region
        // Predicated region
        $region33: #{multi_head_attention.1} parent=31 // pred_check
          %p235 = pneg %p36
        $region34: #{multi_head_attention.1} parent=31 // pred_check_branch
          %237 = sbr.rel (%p235) target = $region36
        $region35: #{multi_head_attention.1} parent=31 // pred_region
          %p238 = scmp.lt.s32.totalorder %s16, 1
          %s239 = scalar_select %p238, %s16, 1
          %s240 = smul.addr %s239, 8
          %s241 = scalar_lea.vmem %s0, %s240
        $region36: #{multi_head_attention.1} parent=31 // pred_fallthru
          _
        // Predicated region
        $region37: #{multi_head_attention.1} parent=31 // pred_check
          %p242 = pneg %p62
        $region38: #{multi_head_attention.1} parent=31 // pred_check_branch
          %244 = sbr.rel (%p242) target = $region40
        $region39: #{multi_head_attention.1} parent=31 // pred_region
          %p245 = scmp.lt.s32.totalorder %s16, 1
          %s246 = scalar_select %p245, %s16, 1
          %s247 = smul.addr %s246, 8
          %s248 = scalar_lea.vmem %s1, %s247
        $region40: #{multi_head_attention.1} parent=31 // pred_fallthru
          _
        // Predicated region
        $region41: #{multi_head_attention.1} parent=31 // pred_check
          %p249 = pneg %p88
        $region42: #{multi_head_attention.1} parent=31 // pred_check_branch
          %251 = sbr.rel (%p249) target = $region44
        $region43: #{multi_head_attention.1} parent=31 // pred_region
          %p252 = scmp.lt.s32.totalorder %s16, 1
          %s253 = scalar_select %p252, %s16, 1
          %s254 = smul.addr %s253, 8
          %s255 = scalar_lea.vmem %s2, %s254
        $region44: #{multi_head_attention.1} parent=31 // pred_fallthru
          _
      $region32: #{multi_head_attention.1} parent=5 // pred_fallthru
        _
      %p256 = scmp.le.s32.totalorder 1, %s16
      %p257 = scmp.lt.s32.totalorder %s16, 3
      %p258 = pnand %p256, %p257
      %p259 = pneg %p258
      // Predicated region
      $region45: #{multi_head_attention.1} parent=5 // pred_check
        _
      $region46: #{multi_head_attention.1} parent=5 // pred_check_branch
        %261 = sbr.rel (%p258) target = $region48
      $region47: #{multi_head_attention.1} parent=5 // pred_region
        %s262 = ssub.s32 %s16, 1
        %p263 = scmp.lt.s32.totalorder %s21, 1
        %s264 = scalar_select %p263, %s21, 1
        %s265 = smul.addr %s264, 8
        %s266 = scalar_lea.vmem %s0, %s265
        %p267 = pneg %p42
        %p268 = pneg %p39
        %p269 = scmp.lt.s32.totalorder %s21, 1
        %s270 = scalar_select %p269, %s21, 1
        %s271 = smul.addr %s270, 8
        %s272 = scalar_lea.vmem %s1, %s271
        %p273 = pneg %p68
        %p274 = pneg %p65
        %p275 = scmp.lt.s32.totalorder %s21, 1
        %s276 = scalar_select %p275, %s21, 1
        %s277 = smul.addr %s276, 8
        %s278 = scalar_lea.vmem %s2, %s277
        %p279 = pneg %p94
        %p280 = pneg %p91
        %p281 = pneg %p115
        %p282 = pneg %p112
        %p283 = pneg %p136
        %p284 = pneg %p133
        %p285 = pneg %p157
        %p286 = pneg %p154
        %p287 = pneg %p178
        %p288 = pneg %p175
        %p289 = pneg %p204
        %p290 = pneg %p201
        %s291 = sand.u32 %s191, 1
        %s292 = scalar_lea.sflag [#allocation3], %s291
        %s293 = sand.u32 %s191, 1
        %s294 = smul.addr %s293, 8
        %s295 = scalar_lea.vmem [#allocation2], %s294
        %p296 = scmp.lt.s32.totalorder %s21, 1
        %s297 = scalar_select %p296, %s21, 1
        %s298 = smul.addr %s297, 8
        %s299 = scalar_lea.vmem %s0, %s298
        %p300 = scmp.lt.s32.totalorder %s21, 1
        %s301 = scalar_select %p300, %s21, 1
        %s302 = smul.addr %s301, 8
        %s303 = scalar_lea.vmem %s1, %s302
        %p304 = scmp.lt.s32.totalorder %s21, 1
        %s305 = scalar_select %p304, %s21, 1
        %s306 = smul.addr %s305, 8
        %s307 = scalar_lea.vmem %s2, %s306
        %v308 = vld [vmem:[%s299] sm:$0xff]
        %v309 = vld [vmem:[%s303] sm:$0xff]
        %v310 = vld [vmem:[%s307] sm:$0xff]
        %v311 = vld [vmem:[%s3] sm:$0xff]
        %v312 = vld [vmem:[%s3 + $0x8] sm:$0xff]
        %v313 = vld [vmem:[%s3 + $0x10] sm:$0xff]
        %v314 = vld [vmem:[%s3 + $0x18] sm:$0xff]
        %v315 = vld [vmem:[%s4] sm:$0x1]
        %v317 = vperm.slane %v315, 0
        %vm319 = vcmask 261120
        %v321 = vsel %vm319, %v308, 0
        %v324 = vsel %vm319, %v309, 0
        %v327 = vsel %vm319, %v310, 0
        %329 = vmatpush.msra.mxu0 0.0
        %330 = vmatpush.msra.mxu0 0.0
        %331 = vmatpush.msra.mxu0 0.0
        %332 = vmatpush.msra.mxu0 0.0
        %333 = vmatpush.msra.mxu0 0.0
        %334 = vmatpush.msra.mxu0 0.0
        %335 = vmatpush.msra.mxu0 0.0
        %336 = vmatpush.msra.mxu0 0.0
        %337 = vmatpush.msra.mxu0 0.0
        %338 = vmatpush.msra.mxu0 0.0
        %339 = vmatpush.msra.mxu0 0.0
        %340 = vmatpush.msra.mxu0 0.0
        %341 = vmatpush.msra.mxu0 %v314
        %342 = vmatpush.msra.mxu0 %v313
        %343 = vmatpush.msra.mxu0 %v312
        %344 = vmatpush.msra.mxu0 %v311
        %345 = vmatmul.f32.gmra.mxu0 %v321
        %v346 = vpop.f32.mrf.mxu0
        %v347 = vadd.f32 %v317, %v346
        %348 = vmatmul.f32.gmra.mxu0 %v324
        %v349 = vpop.f32.mrf.mxu0
        %v350 = vadd.f32 %v317, %v349
        %351 = vmatmul.f32.gmra.mxu0 %v327
        %v352 = vpop.f32.mrf.mxu0
        %v353 = vadd.f32 %v317, %v352
        %354 = vdwg.mxu0
        %356 = vrot.lane.b32.xlu0 %v350, 96
        %v357 = vpop.permute.xlu0 %356
        %vm358 = vcmask 64512
        %v360 = vsel %vm358, %v347, 0
        %v362 = vsel %vm358, %v357, 0
        %364 = vmatpush.xpose.msra.mxu0 0.0
        %365 = vmatpush.xpose.msra.mxu0 0.0
        %366 = vmatpush.xpose.msra.mxu0 0.0
        %367 = vmatpush.xpose.msra.mxu0 0.0
        %368 = vmatpush.xpose.msra.mxu0 0.0
        %369 = vmatpush.xpose.msra.mxu0 0.0
        %370 = vmatpush.xpose.msra.mxu0 0.0
        %371 = vmatpush.xpose.msra.mxu0 0.0
        %372 = vmatpush.xpose.msra.mxu0 0.0
        %373 = vmatpush.xpose.msra.mxu0 0.0
        %374 = vmatpush.xpose.msra.mxu0 0.0
        %375 = vmatpush.xpose.msra.mxu0 0.0
        %376 = vmatpush.xpose.msra.mxu0 0.0
        %377 = vmatpush.xpose.msra.mxu0 0.0
        %378 = vmatpush.xpose.msra.mxu0 0.0
        %379 = vmatpush.xpose.msra.mxu0 %v362
        %380 = vmatmul.f32.gmra.mxu0 %v360
        %v381 = vpop.f32.mrf.mxu0
        %v382 = vadd.f32 0.0, %v381
        %383 = vdwg.mxu0
        %v384 = vsel %vm358, %v382, -inf
        %385 = vmax.xlane.f32.xlu0 %v384
        %v386 = vpop.xlane.xlu0 %385
        %v387 = vsub.f32 %v382, %v386
        %v388 = vmul.f32 %v387, 1.442695
        %v389 = vpow.pop %v388
        %v390 = vsel %vm358, %v389, 0.0
        %391 = vadd.xlane.f32.xlu0 %v390
        %v392 = vpop.xlane.xlu0 %391
        %394 = vrot.lane.b32.xlu0 %v353, 64
        %v395 = vpop.permute.xlu0 %394
        %v398 = vsel %vm358, %v389, 0
        %400 = vmatpush.msra.mxu0 0.0
        %401 = vmatpush.msra.mxu0 0.0
        %402 = vmatpush.msra.mxu0 0.0
        %403 = vmatpush.msra.mxu0 0.0
        %404 = vmatpush.msra.mxu0 0.0
        %405 = vmatpush.msra.mxu0 0.0
        %406 = vmatpush.msra.mxu0 0.0
        %407 = vmatpush.msra.mxu0 0.0
        %408 = vmatpush.msra.mxu0 0.0
        %409 = vmatpush.msra.mxu0 0.0
        %410 = vmatpush.msra.mxu0 0.0
        %411 = vmatpush.msra.mxu0 0.0
        %412 = vmatpush.msra.mxu0 0.0
        %413 = vmatpush.msra.mxu0 0.0
        %414 = vmatpush.msra.mxu0 0.0
        %415 = vmatpush.msra.mxu0 %v395
        %416 = vmatmul.f32.gmra.mxu0 %v398
        %v417 = vpop.f32.mrf.mxu0
        %v418 = vadd.f32 0.0, %v417
        %419 = vdwg.mxu0
        %v420 = vrcp.pop %v392
        %v421 = vmul.f32 %v418, %v420
        %422 = vrot.lane.b32.xlu0 %v347, 120
        %v423 = vpop.permute.xlu0 %422
        %424 = vrot.lane.b32.xlu0 %v350, 88
        %v425 = vpop.permute.xlu0 %424
        %v426 = vsel %vm358, %v423, 0
        %v428 = vsel %vm358, %v425, 0
        %430 = vmatpush.xpose.msra.mxu0 0.0
        %431 = vmatpush.xpose.msra.mxu0 0.0
        %432 = vmatpush.xpose.msra.mxu0 0.0
        %433 = vmatpush.xpose.msra.mxu0 0.0
        %434 = vmatpush.xpose.msra.mxu0 0.0
        %435 = vmatpush.xpose.msra.mxu0 0.0
        %436 = vmatpush.xpose.msra.mxu0 0.0
        %437 = vmatpush.xpose.msra.mxu0 0.0
        %438 = vmatpush.xpose.msra.mxu0 0.0
        %439 = vmatpush.xpose.msra.mxu0 0.0
        %440 = vmatpush.xpose.msra.mxu0 0.0
        %441 = vmatpush.xpose.msra.mxu0 0.0
        %442 = vmatpush.xpose.msra.mxu0 0.0
        %443 = vmatpush.xpose.msra.mxu0 0.0
        %444 = vmatpush.xpose.msra.mxu0 0.0
        %445 = vmatpush.xpose.msra.mxu0 %v428
        %446 = vmatmul.f32.gmra.mxu0 %v426
        %v447 = vpop.f32.mrf.mxu0
        %v448 = vadd.f32 0.0, %v447
        %449 = vdwg.mxu0
        %v450 = vsel %vm358, %v448, -inf
        %451 = vmax.xlane.f32.xlu0 %v450
        %v452 = vpop.xlane.xlu0 %451
        %v453 = vsub.f32 %v448, %v452
        %v454 = vmul.f32 %v453, 1.442695
        %v455 = vpow.pop %v454
        %v456 = vsel %vm358, %v455, 0.0
        %457 = vadd.xlane.f32.xlu0 %v456
        %v458 = vpop.xlane.xlu0 %457
        %459 = vrot.lane.b32.xlu0 %v353, 56
        %v460 = vpop.permute.xlu0 %459
        %v463 = vsel %vm358, %v455, 0
        %465 = vmatpush.msra.mxu0 0.0
        %466 = vmatpush.msra.mxu0 0.0
        %467 = vmatpush.msra.mxu0 0.0
        %468 = vmatpush.msra.mxu0 0.0
        %469 = vmatpush.msra.mxu0 0.0
        %470 = vmatpush.msra.mxu0 0.0
        %471 = vmatpush.msra.mxu0 0.0
        %472 = vmatpush.msra.mxu0 0.0
        %473 = vmatpush.msra.mxu0 0.0
        %474 = vmatpush.msra.mxu0 0.0
        %475 = vmatpush.msra.mxu0 0.0
        %476 = vmatpush.msra.mxu0 0.0
        %477 = vmatpush.msra.mxu0 0.0
        %478 = vmatpush.msra.mxu0 0.0
        %479 = vmatpush.msra.mxu0 0.0
        %480 = vmatpush.msra.mxu0 %v460
        %481 = vmatmul.f32.gmra.mxu0 %v463
        %v482 = vpop.f32.mrf.mxu0
        %v483 = vadd.f32 0.0, %v482
        %484 = vdwg.mxu0
        %v485 = vrcp.pop %v458
        %v486 = vmul.f32 %v483, %v485
        %487 = vrot.lane.b32.xlu0 %v347, 112
        %v488 = vpop.permute.xlu0 %487
        %489 = vrot.lane.b32.xlu0 %v350, 80
        %v490 = vpop.permute.xlu0 %489
        %v491 = vsel %vm358, %v488, 0
        %v493 = vsel %vm358, %v490, 0
        %495 = vmatpush.xpose.msra.mxu0 0.0
        %496 = vmatpush.xpose.msra.mxu0 0.0
        %497 = vmatpush.xpose.msra.mxu0 0.0
        %498 = vmatpush.xpose.msra.mxu0 0.0
        %499 = vmatpush.xpose.msra.mxu0 0.0
        %500 = vmatpush.xpose.msra.mxu0 0.0
        %501 = vmatpush.xpose.msra.mxu0 0.0
        %502 = vmatpush.xpose.msra.mxu0 0.0
        %503 = vmatpush.xpose.msra.mxu0 0.0
        %504 = vmatpush.xpose.msra.mxu0 0.0
        %505 = vmatpush.xpose.msra.mxu0 0.0
        %506 = vmatpush.xpose.msra.mxu0 0.0
        %507 = vmatpush.xpose.msra.mxu0 0.0
        %508 = vmatpush.xpose.msra.mxu0 0.0
        %509 = vmatpush.xpose.msra.mxu0 0.0
        %510 = vmatpush.xpose.msra.mxu0 %v493
        %511 = vmatmul.f32.gmra.mxu0 %v491
        %v512 = vpop.f32.mrf.mxu0
        %v513 = vadd.f32 0.0, %v512
        %514 = vdwg.mxu0
        %v515 = vsel %vm358, %v513, -inf
        %516 = vmax.xlane.f32.xlu0 %v515
        %v517 = vpop.xlane.xlu0 %516
        %v518 = vsub.f32 %v513, %v517
        %v519 = vmul.f32 %v518, 1.442695
        %v520 = vpow.pop %v519
        %v521 = vsel %vm358, %v520, 0.0
        %522 = vadd.xlane.f32.xlu0 %v521
        %v523 = vpop.xlane.xlu0 %522
        %524 = vrot.lane.b32.xlu0 %v353, 48
        %v525 = vpop.permute.xlu0 %524
        %v528 = vsel %vm358, %v520, 0
        %530 = vmatpush.msra.mxu0 0.0
        %531 = vmatpush.msra.mxu0 0.0
        %532 = vmatpush.msra.mxu0 0.0
        %533 = vmatpush.msra.mxu0 0.0
        %534 = vmatpush.msra.mxu0 0.0
        %535 = vmatpush.msra.mxu0 0.0
        %536 = vmatpush.msra.mxu0 0.0
        %537 = vmatpush.msra.mxu0 0.0
        %538 = vmatpush.msra.mxu0 0.0
        %539 = vmatpush.msra.mxu0 0.0
        %540 = vmatpush.msra.mxu0 0.0
        %541 = vmatpush.msra.mxu0 0.0
        %542 = vmatpush.msra.mxu0 0.0
        %543 = vmatpush.msra.mxu0 0.0
        %544 = vmatpush.msra.mxu0 0.0
        %545 = vmatpush.msra.mxu0 %v525
        %546 = vmatmul.f32.gmra.mxu0 %v528
        %v547 = vpop.f32.mrf.mxu0
        %v548 = vadd.f32 0.0, %v547
        %549 = vdwg.mxu0
        %v550 = vrcp.pop %v523
        %v551 = vmul.f32 %v548, %v550
        %552 = vrot.lane.b32.xlu0 %v347, 104
        %v553 = vpop.permute.xlu0 %552
        %554 = vrot.lane.b32.xlu0 %v350, 72
        %v555 = vpop.permute.xlu0 %554
        %v556 = vsel %vm358, %v553, 0
        %v558 = vsel %vm358, %v555, 0
        %560 = vmatpush.xpose.msra.mxu0 0.0
        %561 = vmatpush.xpose.msra.mxu0 0.0
        %562 = vmatpush.xpose.msra.mxu0 0.0
        %563 = vmatpush.xpose.msra.mxu0 0.0
        %564 = vmatpush.xpose.msra.mxu0 0.0
        %565 = vmatpush.xpose.msra.mxu0 0.0
        %566 = vmatpush.xpose.msra.mxu0 0.0
        %567 = vmatpush.xpose.msra.mxu0 0.0
        %568 = vmatpush.xpose.msra.mxu0 0.0
        %569 = vmatpush.xpose.msra.mxu0 0.0
        %570 = vmatpush.xpose.msra.mxu0 0.0
        %571 = vmatpush.xpose.msra.mxu0 0.0
        %572 = vmatpush.xpose.msra.mxu0 0.0
        %573 = vmatpush.xpose.msra.mxu0 0.0
        %574 = vmatpush.xpose.msra.mxu0 0.0
        %575 = vmatpush.xpose.msra.mxu0 %v558
        %576 = vmatmul.f32.gmra.mxu0 %v556
        %v577 = vpop.f32.mrf.mxu0
        %v578 = vadd.f32 0.0, %v577
        %579 = vdwg.mxu0
        %v580 = vsel %vm358, %v578, -inf
        %581 = vmax.xlane.f32.xlu0 %v580
        %v582 = vpop.xlane.xlu0 %581
        %v583 = vsub.f32 %v578, %v582
        %v584 = vmul.f32 %v583, 1.442695
        %v585 = vpow.pop %v584
        %v586 = vsel %vm358, %v585, 0.0
        %587 = vadd.xlane.f32.xlu0 %v586
        %v588 = vpop.xlane.xlu0 %587
        %589 = vrot.lane.b32.xlu0 %v353, 40
        %v590 = vpop.permute.xlu0 %589
        %v593 = vsel %vm358, %v585, 0
        %595 = vmatpush.msra.mxu0 0.0
        %596 = vmatpush.msra.mxu0 0.0
        %597 = vmatpush.msra.mxu0 0.0
        %598 = vmatpush.msra.mxu0 0.0
        %599 = vmatpush.msra.mxu0 0.0
        %600 = vmatpush.msra.mxu0 0.0
        %601 = vmatpush.msra.mxu0 0.0
        %602 = vmatpush.msra.mxu0 0.0
        %603 = vmatpush.msra.mxu0 0.0
        %604 = vmatpush.msra.mxu0 0.0
        %605 = vmatpush.msra.mxu0 0.0
        %606 = vmatpush.msra.mxu0 0.0
        %607 = vmatpush.msra.mxu0 0.0
        %608 = vmatpush.msra.mxu0 0.0
        %609 = vmatpush.msra.mxu0 0.0
        %610 = vmatpush.msra.mxu0 %v590
        %611 = vmatmul.f32.gmra.mxu0 %v593
        %v612 = vpop.f32.mrf.mxu0
        %v613 = vadd.f32 0.0, %v612
        %614 = vdwg.mxu0
        %v615 = vrcp.pop %v588
        %v616 = vmul.f32 %v613, %v615
        %618 = vrot.lane.b32.xlu0 %v486, 8
        %v619 = vpop.permute.xlu0 %618
        %622 = vrot.lane.b32.xlu0 %v551, 16
        %v623 = vpop.permute.xlu0 %622
        %626 = vrot.lane.b32.xlu0 %v616, 24
        %v627 = vpop.permute.xlu0 %626
        %v629 = vsel %vm358, %v421, %v619
        %vm630 = vcmask 130048
        %v631 = vsel %vm630, %v629, %v623
        %vm632 = vcmask 195584
        %v633 = vsel %vm632, %v631, %v627
        %v634 = vld [vmem:[%s5] sm:$0xff]
        %v635 = vld [vmem:[%s5 + $0x8] sm:$0xff]
        %v636 = vld [vmem:[%s5 + $0x10] sm:$0xff]
        %v637 = vld [vmem:[%s5 + $0x18] sm:$0xff]
        %v638 = vld [vmem:[%s6] sm:$0x1]
        %v640 = vperm.slane %v638, 0
        %v643 = vsel %vm319, %v633, 0
        %645 = vmatpush.msra.mxu0 0.0
        %646 = vmatpush.msra.mxu0 0.0
        %647 = vmatpush.msra.mxu0 0.0
        %648 = vmatpush.msra.mxu0 0.0
        %649 = vmatpush.msra.mxu0 0.0
        %650 = vmatpush.msra.mxu0 0.0
        %651 = vmatpush.msra.mxu0 0.0
        %652 = vmatpush.msra.mxu0 0.0
        %653 = vmatpush.msra.mxu0 0.0
        %654 = vmatpush.msra.mxu0 0.0
        %655 = vmatpush.msra.mxu0 0.0
        %656 = vmatpush.msra.mxu0 0.0
        %657 = vmatpush.msra.mxu0 %v637
        %658 = vmatpush.msra.mxu0 %v636
        %659 = vmatpush.msra.mxu0 %v635
        %660 = vmatpush.msra.mxu0 %v634
        %661 = vmatmul.f32.gmra.mxu0 %v643
        %v662 = vpop.f32.mrf.mxu0
        %v663 = vadd.f32 %v640, %v662
        %664 = vdwg.mxu0
        %665 = vst.msk [vmem:[%s295] sm:$0xff] %vm319, %v663
        %s666 = sand.u32 %s191, 1
        %s667 = scalar_lea.sflag [#allocation3], %s666
        %s668 = sand.u32 %s191, 1
        %s669 = smul.addr %s668, 8
        %s670 = scalar_lea.vmem [#allocation2], %s669
        // Predicated region
        $region49: #{multi_head_attention.1} parent=47 // pred_check
          %p671 = pneg %p201
        $region50: #{multi_head_attention.1} parent=47 // pred_check_branch
          %673 = sbr.rel (%p671) target = $region52
        $region51: #{multi_head_attention.1} parent=47 // pred_region
          %675 = vsyncadd %s667, 0
          %s676 = smul.addr %s21, 8
          %s677 = scalar_lea.hbm %s7, %s676
          %s679 = sshll.u32 %s670, 4
          %s680 = int_to_ptr.vmem [resolvable:$true] %s679
          %s681 = sshll.u32 %s677, 4
          %s682 = int_to_ptr.hbm [resolvable:$true] %s681
          %684 = dma.vmem_to_hbm [thread:$0]  %s680, 128, %s682, %s667
        $region52: #{multi_head_attention.1} parent=47 // pred_fallthru
          _
      $region48: #{multi_head_attention.1} parent=5 // pred_fallthru
        _
      %p685 = scmp.le.s32.totalorder 2, %s16
      // Predicated region
      $region53: #{multi_head_attention.1} parent=5 // pred_check
        %p686 = pneg %p685
      $region54: #{multi_head_attention.1} parent=5 // pred_check_branch
        %688 = sbr.rel (%p686) target = $region56
      $region55: #{multi_head_attention.1} parent=5 // pred_region
        %s689 = ssub.s32 %s16, 2
        // Predicated region
        $region57: #{multi_head_attention.1} parent=55 // pred_check
          %p690 = pneg %p207
        $region58: #{multi_head_attention.1} parent=55 // pred_check_branch
          %692 = sbr.rel (%p690) target = $region60
        $region59: #{multi_head_attention.1} parent=55 // pred_region
          %s693 = sand.u32 %s192, 1
          %s694 = scalar_lea.sflag [#allocation3], %s693
          %s695 = sand.u32 %s192, 1
          %s696 = smul.addr %s695, 8
          %s697 = scalar_lea.vmem [#allocation2], %s696
          %699 = dma.done %s694, 128
        $region60: #{multi_head_attention.1} parent=55 // pred_fallthru
          _
      $region56: #{multi_head_attention.1} parent=5 // pred_fallthru
        _
    $region6: #{multi_head_attention.1} parent=1 // loop_footer
      %s20 = sadd.s32 1, %s16
    $region7: #{multi_head_attention.1} parent=1 // loop_footer_branch
      %15 = sbr.rel target = $region3
    $region8: #{multi_head_attention.1} parent=1 // loop_exit
      _
    %700 = vsyncpa [#allocation3], 1
    %s701 = scalar_lea.sflag [#allocation3], 1
    %702 = vsyncpa %s701, 1

</llo_original>
